<compile_context>
chip_gen: v5e
topology: v5e:2x2
jax: 0.10.0
libtpu: 0.0.40
codegen_flags: <defaults>
</compile_context>

<pallas_src>
import jax
import jax.numpy as jnp
from jax import lax
from jax.experimental import pallas as pl
from jax.experimental.pallas import tpu as pltpu


# --------------------------------------------------------------------------
# generation-aware defaults (weight-streaming roofline: arithmetic intensity
# w.r.t. expert weights is exactly tn flops/byte)
# --------------------------------------------------------------------------
def _tpu_defaults():
    """Return (tn, th, vmem_limit_bytes) for the current TPU generation."""
    kind = ""
    try:
        kind = jax.devices()[0].device_kind.lower()
    except Exception:
        pass
    if "v5" in kind:
        # v5e: 197 TF/s vs ~0.82 TB/s -> tn=256 already at the roofline knee.
        return 256, 512, 96 * 1024 * 1024
    if "v7" in kind or "7x" in kind:
        # v7x: only 64 MiB VMEM per TC -> smaller H chunk, tighter limit.
        return 512, 256, 52 * 1024 * 1024
    # v6e (default): 128 MiB VMEM, ~1.4 TB/s HBM -> big tiles.
    return 512, 512, 96 * 1024 * 1024


def choose_hidden_tile(H):
    """Pick the H (reduction) chunk size used for both weight prep and kernel."""
    _, th_def, _ = _tpu_defaults()
    return th_def if (H > th_def and H % th_def == 0) else H


def prepare_moe_weights(w1, w3, w2, th):
    """Call ONCE at init (outside the per-step path).

    Interleaves W1/W3 per H-chunk into a single (E, C, 2*H) operand and casts
    everything to bf16, so the hot path does no weight-sized HBM rewrite and
    the kernel issues one wide MXU matmul for the gate/up projections.
    """
    E, C, H = w1.shape
    assert H % th == 0
    n_h = H // th
    w13 = jnp.concatenate(
        [w1.reshape(E, C, n_h, th), w3.reshape(E, C, n_h, th)], axis=-1
    ).reshape(E, C, 2 * H).astype(jnp.bfloat16)
    return w13, w2.astype(jnp.bfloat16)


# --------------------------------------------------------------------------
# kernel
# --------------------------------------------------------------------------
def _moe_kernel(te_ref, nv_ref, x_ref, p_ref, w13_ref, w2_ref, o_ref):
    # te_ref : (n_tiles,) int32 SMEM — expert id per token tile (index_maps only)
    # nv_ref : (1,)       int32 SMEM — number of valid (non-slack) token tiles
    # x_ref  : (tn, C)    bf16  routed-token tile
    # p_ref  : (tn, 1)    f32   per-row routing weight (0 on padding rows)
    # w13_ref: (C, 2*th)  bf16  [W1 chunk | W3 chunk] of this tile's expert
    # w2_ref : (th, C)    bf16
    # o_ref  : (tn, C)    f32   per-assignment expert output, accumulated over hj
    t = pl.program_id(0)
    hj = pl.program_id(1)
    th = w2_ref.shape[0]

    @pl.when(hj == 0)
    def _():
        o_ref[...] = jnp.zeros_like(o_ref)

    # Slack tiles past sum(padded group sizes) carry zero routing weight and are
    # never read by the final gather — skip their MXU/VPU work entirely.
    @pl.when(t < nv_ref[0])
    def _():
        x = x_ref[...]
        # one wide MXU matmul for W1|W3 (fewer push/drain boundaries)
        h13 = jnp.dot(x, w13_ref[...], preferred_element_type=jnp.float32)  # (tn, 2*th)
        h1 = h13[:, :th]
        h3 = h13[:, th:]
        # SwiGLU; routing prob folded here (row scalar commutes with the matmul),
        # so padded rows (p == 0) contribute exactly zero.
        h = (h1 * lax.logistic(h1)) * h3 * p_ref[...]                        # (tn, th) f32
        o_ref[...] += jnp.dot(h.astype(jnp.bfloat16), w2_ref[...],
                              preferred_element_type=jnp.float32)            # (tn, C)


# --------------------------------------------------------------------------
# wrapper
# --------------------------------------------------------------------------
def sparse_moe_pallas(x, gate_w, w13, w2, n_activated_experts, *, th,
                      norm_probs=True, tn=None, vmem_limit_bytes=None):
    """x: (B,T,C); gate_w: (C,E); w13: (E,C,2H) bf16 (from prepare_moe_weights);
    w2: (E,H,C) bf16."""
    B, T, C = x.shape
    E = w13.shape[0]
    H = w13.shape[-1] // 2
    K = n_activated_experts
    N = B * T
    A = N * K                                   # (token, expert) assignments
    xf = x.reshape(N, C)

    tn_def, _, vmem_def = _tpu_defaults()
    if tn is None:
        tn = tn_def if A >= tn_def else -(-A // 16) * 16   # small-problem fallback
    if vmem_limit_bytes is None:
        vmem_limit_bytes = vmem_def
    assert tn % 16 == 0, "bf16 sublane packing is (16, 128)"
    assert H % th == 0 and (th == H or th % 128 == 0)
    n_h = H // th

    # defensively ensure bf16 operands (no-op when prepare_moe_weights was used)
    if w13.dtype != jnp.bfloat16:
        w13 = w13.astype(jnp.bfloat16)
    if w2.dtype != jnp.bfloat16:
        w2 = w2.astype(jnp.bfloat16)

    # ---- router (plain JAX, f32) -------------------------------------------
    logits = xf.astype(jnp.float32) @ gate_w.astype(jnp.float32)        # (N, E)
    probs = jax.nn.softmax(logits, axis=-1)
    topk_p, topk_i = lax.top_k(probs, K)                                # (N, K)
    if norm_probs:
        topk_p = topk_p / jnp.sum(topk_p, axis=-1, keepdims=True)

    # ---- sort assignments by expert, pad each group to a tn multiple -------
    flat_e = topk_i.reshape(A).astype(jnp.int32)
    flat_t = jnp.repeat(jnp.arange(N, dtype=jnp.int32), K)
    flat_p = topk_p.reshape(A).astype(jnp.float32)

    order = jnp.argsort(flat_e)
    sort_e = flat_e[order]
    sort_t = flat_t[order]
    sort_p = flat_p[order]

    g = jnp.bincount(flat_e, length=E)          # per-expert assignment counts
    pg = ((g + tn - 1) // tn) * tn              # padded counts
    cum_pg = jnp.cumsum(pg)
    poff = cum_pg - pg                          # padded group starts
    soff = jnp.cumsum(g) - g                    # sorted group starts

    # static row bound: A assignments + at most (tn-1) padding per non-empty expert
    P = -(-(A + min(E, A) * (tn - 1)) // tn) * tn
    n_tiles = P // tn

    rank = jnp.arange(A, dtype=jnp.int32) - soff[sort_e]
    pos = (poff[sort_e] + rank).astype(jnp.int32)        # padded row of sorted assignment
    pad_t = jnp.zeros((P,), jnp.int32).at[pos].set(sort_t)
    pad_p = jnp.zeros((P,), jnp.float32).at[pos].set(sort_p)

    # expert id per token tile (scalar prefetch -> data-dependent index_map);
    # slack tiles (past sum(pg)) get clipped id E-1 but are compute-gated.
    row_starts = jnp.arange(n_tiles, dtype=jnp.int32) * tn
    tile_expert = jnp.clip(
        jnp.searchsorted(cum_pg, row_starts, side="right"), 0, E - 1
    ).astype(jnp.int32)
    n_valid = (cum_pg[-1] // tn).astype(jnp.int32).reshape(1)

    # ---- gather routed tokens (bf16 MXU operand) ----------------------------
    x_gath = jnp.take(xf, pad_t, axis=0).astype(jnp.bfloat16)           # (P, C)
    pad_p2d = pad_p[:, None]                                            # (P, 1)

    # ---- expert compute (Pallas) --------------------------------------------
    contrib = pl.pallas_call(
        _moe_kernel,
        out_shape=jax.ShapeDtypeStruct((P, C), jnp.float32),
        grid_spec=pltpu.PrefetchScalarGridSpec(
            num_scalar_prefetch=2,
            grid=(n_tiles, n_h),
            in_specs=[
                pl.BlockSpec((tn, C), lambda t, hj, te, nv: (t, 0)),        # x tile
                pl.BlockSpec((tn, 1), lambda t, hj, te, nv: (t, 0)),        # probs tile
                pl.BlockSpec((pl.Squeezed(), C, 2 * th),
                             lambda t, hj, te, nv: (te[t], 0, hj)),         # [W1|W3][e] chunk hj
                pl.BlockSpec((pl.Squeezed(), th, C),
                             lambda t, hj, te, nv: (te[t], hj, 0)),         # W2[e][hj, :]
            ],
            out_specs=pl.BlockSpec((tn, C), lambda t, hj, te, nv: (t, 0)),
        ),
        compiler_params=pltpu.CompilerParams(
            dimension_semantics=("parallel", "arbitrary"),
            vmem_limit_bytes=vmem_limit_bytes,
        ),
    )(tile_expert, n_valid, x_gath, pad_p2d, w13, w2)

    # ---- combine: dense gather + (N, K, C) sum (no TPU scatter-add) ---------
    pos_flat = jnp.zeros((A,), jnp.int32).at[order].set(pos)            # flat -> padded row
    contrib_flat = jnp.take(contrib, pos_flat, axis=0)                  # (A, C) f32
    y = contrib_flat.reshape(N, K, C).sum(axis=1)                       # (N, C)
    # TODO(synk): shared_expert / shared_gate are Optional and None in this config.
    return y.astype(x.dtype).reshape(B, T, C)


# --------------------------------------------------------------------------
# reference (mirrors the PyTorch dense-mask loop; MXU operands cast to bf16
# as in the kernel so the comparison tolerance is meaningful)
# --------------------------------------------------------------------------
def _reference(x, gate_w, w1, w3, w2, k, norm_probs=True):
    B, T, C = x.shape
    E = w1.shape[0]
    xf = x.reshape(-1, C)
    logits = xf.astype(jnp.float32) @ gate_w.astype(jnp.float32)
    probs = jax.nn.softmax(logits, axis=-1)
    topk_p, topk_i = lax.top_k(probs, k)
    if norm_probs:
        topk_p = topk_p / jnp.sum(topk_p, axis=-1, keepdims=True)
    dense_p = jnp.sum(
        jax.nn.one_hot(topk_i, E, dtype=jnp.float32) * topk_p[..., None], axis=1)
    xb = xf.astype(jnp.bfloat16)
    y = jnp.zeros((xf.shape[0], C), jnp.float32)
    for e in range(E):
        h1 = jnp.dot(xb, w1[e].astype(jnp.bfloat16), preferred_element_type=jnp.float32)
        h3 = jnp.dot(xb, w3[e].astype(jnp.bfloat16), preferred_element_type=jnp.float32)
        h = (h1 * jax.nn.sigmoid(h1)) * h3
        ye = jnp.dot(h.astype(jnp.bfloat16), w2[e].astype(jnp.bfloat16),
                     preferred_element_type=jnp.float32)
        y = y + dense_p[:, e:e + 1] * ye
    return y.astype(x.dtype).reshape(B, T, C)


if __name__ == "__main__":
    key = jax.random.PRNGKey(0)
    B, T, C, H = 2, 8, 32, 64
    E, K = 4, 2

    k1, k2, k3, k4, k5 = jax.random.split(key, 5)
    x = jax.random.normal(k1, (B, T, C), dtype=jnp.float32)
    gate_w = jax.random.normal(k2, (C, E), dtype=jnp.float32) * 0.1
    w1 = jax.random.normal(k3, (E, C, H), dtype=jnp.float32) * (1.0 / jnp.sqrt(C))
    w3 = jax.random.normal(k4, (E, C, H), dtype=jnp.float32) * (1.0 / jnp.sqrt(C))
    w2 = jax.random.normal(k5, (E, H, C), dtype=jnp.float32) * (1.0 / jnp.sqrt(H))

    # one-time weight prep (outside the hot path): interleave W1/W3 + bf16 cast
    th = choose_hidden_tile(H)
    w13_b, w2_b = prepare_moe_weights(w1, w3, w2, th)

    out = sparse_moe_pallas(x, gate_w, w13_b, w2_b, K, th=th, norm_probs=True)
    out = jax.block_until_ready(out)

    ref = _reference(x, gate_w, w1, w3, w2, K, norm_probs=True)
    assert out.shape == (B, T, C)
    max_err = float(jnp.max(jnp.abs(out - ref)))
    # bf16 MXU operands (and the prob fold before the bf16 cast of h) give
    # ~bf16-epsilon level differences vs the reference ordering.
    assert jnp.allclose(out, ref, atol=2e-2, rtol=2e-2), \
        f"mismatch vs reference (max abs err {max_err})"
    print("KERNEL_OK")
</pallas_src>

<mosaic_0001>
module attributes {stable_mosaic.version = 11 : i64} {
  func.func @_moe_kernel(%arg0: i32, %arg1: i32, %arg2: memref<5xi32, #tpu.memory_space<smem>>, %arg3: memref<1xi32, #tpu.memory_space<smem>>, %arg4: memref<32x32xbf16, #tpu.memory_space<vmem>>, %arg5: memref<32x1xf32, #tpu.memory_space<vmem>>, %arg6: memref<1x32x128xbf16, #tpu.memory_space<vmem>>, %arg7: memref<1x64x32xbf16, #tpu.memory_space<vmem>>, %arg8: memref<32x32xf32, #tpu.memory_space<vmem>>) attributes {dimension_semantics = [#tpu.dimension_semantics<parallel>, #tpu.dimension_semantics<arbitrary>], iteration_bounds = array<i64: 5, 1>, scalar_prefetch = 2 : i64, scratch_operands = 0 : i64, tpu.core_type = #tpu.core_type<tc>, window_params = [{transform_indices = @transform_0, window_bounds = array<i64: 32, 32>}, {transform_indices = @transform_1, window_bounds = array<i64: 32, 1>}, {transform_indices = @transform_2, window_bounds = array<i64: 1, 32, 128>}, {transform_indices = @transform_3, window_bounds = array<i64: 1, 64, 32>}, {transform_indices = @transform_4, window_bounds = array<i64: 32, 32>}]} {
    %c0_i32 = arith.constant 0 : i32
    %0 = arith.cmpi eq, %arg1, %c0_i32 : i32
    %1 = arith.extui %0 : i1 to i32
    %c0_i32_0 = arith.constant 0 : i32
    %2 = arith.cmpi ne, %1, %c0_i32_0 : i32
    scf.if %2 {
      %cst = arith.constant 0.000000e+00 : f32
      %7 = vector.broadcast %cst : f32 to vector<32x32xf32>
      %c0_2 = arith.constant 0 : index
      %c0_3 = arith.constant 0 : index
      %8 = vector.load %arg8[%c0_2, %c0_3] : memref<32x32xf32, #tpu.memory_space<vmem>>, vector<32x32xf32>
      tpu.vector_store %arg8[%c0_2, %c0_3], %7 {strides = array<i32>} : memref<32x32xf32, #tpu.memory_space<vmem>>, vector<32x32xf32>,
    } else {
    }
    %c0 = arith.constant 0 : index
    %3 = memref.load %arg3[%c0] : memref<1xi32, #tpu.memory_space<smem>>
    %4 = arith.cmpi slt, %arg0, %3 : i32
    %5 = arith.extui %4 : i1 to i32
    %c0_i32_1 = arith.constant 0 : i32
    %6 = arith.cmpi ne, %5, %c0_i32_1 : i32
    scf.if %6 {
      %c0_2 = arith.constant 0 : index
      %c0_3 = arith.constant 0 : index
      %7 = vector.load %arg4[%c0_2, %c0_3] : memref<32x32xbf16, #tpu.memory_space<vmem>>, vector<32x32xbf16>
      %c0_4 = arith.constant 0 : index
      %c0_5 = arith.constant 0 : index
      %c0_6 = arith.constant 0 : index
      %8 = vector.load %arg6[%c0_4, %c0_5, %c0_6] : memref<1x32x128xbf16, #tpu.memory_space<vmem>>, vector<1x32x128xbf16>
      %9 = vector.shape_cast %8 : vector<1x32x128xbf16> to vector<32x128xbf16>
      %cst = arith.constant dense<0.000000e+00> : vector<32x128xf32>
      %10 = tpu.matmul %7, %9, %cst {dimension_numbers = #tpu.dot_dimension_numbers<[1], [0], [0], [1], [0, 0, 1, 1], [], []>} : vector<32x32xbf16>, vector<32x128xbf16>, vector<32x128xf32> -> vector<32x128xf32>
      %11 = vector.extract_strided_slice %10 {offsets = [0, 0], sizes = [32, 64], strides = [1, 1]} : vector<32x128xf32> to vector<32x64xf32>
      %12 = vector.extract_strided_slice %10 {offsets = [0, 64], sizes = [32, 64], strides = [1, 1]} : vector<32x128xf32> to vector<32x64xf32>
      %13 = arith.negf %11 : vector<32x64xf32>
      %14 = math.exp %13 : vector<32x64xf32>
      %cst_7 = arith.constant 1.000000e+00 : f32
      %15 = vector.broadcast %cst_7 : f32 to vector<32x64xf32>
      %16 = arith.addf %15, %14 : vector<32x64xf32>
      %17 = arith.divf %15, %16 : vector<32x64xf32>
      %18 = arith.mulf %11, %17 : vector<32x64xf32>
      %19 = arith.mulf %18, %12 : vector<32x64xf32>
      %c0_8 = arith.constant 0 : index
      %c0_9 = arith.constant 0 : index
      %20 = vector.load %arg5[%c0_8, %c0_9] : memref<32x1xf32, #tpu.memory_space<vmem>>, vector<32x1xf32>
      %21 = vector.broadcast %20 : vector<32x1xf32> to vector<32x64xf32>
      %22 = arith.mulf %19, %21 : vector<32x64xf32>
      %c0_10 = arith.constant 0 : index
      %c0_11 = arith.constant 0 : index
      %23 = vector.load %arg8[%c0_10, %c0_11] : memref<32x32xf32, #tpu.memory_space<vmem>>, vector<32x32xf32>
      %24 = arith.truncf %22 : vector<32x64xf32> to vector<32x64xbf16>
      %c0_12 = arith.constant 0 : index
      %c0_13 = arith.constant 0 : index
      %c0_14 = arith.constant 0 : index
      %25 = vector.load %arg7[%c0_12, %c0_13, %c0_14] : memref<1x64x32xbf16, #tpu.memory_space<vmem>>, vector<1x64x32xbf16>
      %26 = vector.shape_cast %25 : vector<1x64x32xbf16> to vector<64x32xbf16>
      %cst_15 = arith.constant dense<0.000000e+00> : vector<32x32xf32>
      %27 = tpu.matmul %24, %26, %cst_15 {dimension_numbers = #tpu.dot_dimension_numbers<[1], [0], [0], [1], [0, 0, 1, 1], [], []>} : vector<32x64xbf16>, vector<64x32xbf16>, vector<32x32xf32> -> vector<32x32xf32>
      %28 = arith.addf %23, %27 : vector<32x32xf32>
      %c0_16 = arith.constant 0 : index
      %c0_17 = arith.constant 0 : index
      %29 = vector.load %arg8[%c0_16, %c0_17] : memref<32x32xf32, #tpu.memory_space<vmem>>, vector<32x32xf32>
      tpu.vector_store %arg8[%c0_16, %c0_17], %28 {strides = array<i32>} : memref<32x32xf32, #tpu.memory_space<vmem>>, vector<32x32xf32>,
    } else {
    }
    return
  }
  func.func @transform_0(%arg0: i32, %arg1: i32, %arg2: memref<5xi32, #tpu.memory_space<smem>>, %arg3: memref<1xi32, #tpu.memory_space<smem>>) -> (i32, i32) {
    %c0_i32 = arith.constant 0 : i32
    %c0_i32_0 = arith.constant 0 : i32
    return %arg0, %c0_i32 : i32, i32
  }
  func.func @transform_1(%arg0: i32, %arg1: i32, %arg2: memref<5xi32, #tpu.memory_space<smem>>, %arg3: memref<1xi32, #tpu.memory_space<smem>>) -> (i32, i32) {
    %c0_i32 = arith.constant 0 : i32
    %c0_i32_0 = arith.constant 0 : i32
    return %arg0, %c0_i32 : i32, i32
  }
  func.func @transform_2(%arg0: i32, %arg1: i32, %arg2: memref<5xi32, #tpu.memory_space<smem>>, %arg3: memref<1xi32, #tpu.memory_space<smem>>) -> (i32, i32, i32) {
    %0 = arith.index_cast %arg0 : i32 to index
    %1 = memref.load %arg2[%0] : memref<5xi32, #tpu.memory_space<smem>>
    %c0_i32 = arith.constant 0 : i32
    %c0_i32_0 = arith.constant 0 : i32
    return %1, %c0_i32, %arg1 : i32, i32, i32
  }
  func.func @transform_3(%arg0: i32, %arg1: i32, %arg2: memref<5xi32, #tpu.memory_space<smem>>, %arg3: memref<1xi32, #tpu.memory_space<smem>>) -> (i32, i32, i32) {
    %0 = arith.index_cast %arg0 : i32 to index
    %1 = memref.load %arg2[%0] : memref<5xi32, #tpu.memory_space<smem>>
    %c0_i32 = arith.constant 0 : i32
    %c0_i32_0 = arith.constant 0 : i32
    return %1, %arg1, %c0_i32 : i32, i32, i32
  }
  func.func @transform_4(%arg0: i32, %arg1: i32, %arg2: memref<5xi32, #tpu.memory_space<smem>>, %arg3: memref<1xi32, #tpu.memory_space<smem>>) -> (i32, i32) {
    %c0_i32 = arith.constant 0 : i32
    %c0_i32_0 = arith.constant 0 : i32
    return %arg0, %c0_i32 : i32, i32
  }
}

</mosaic_0001>

<llo_original>
// kernel: tpu_custom_call.1
$region0: #{tpu_custom_call.1}
  #allocation0 [shape = 'u32[]', space=smem, size = 0x4, offset = 0x4, fixed_abs, tag = 'smem constant byte address 0x4 - core index']
  #allocation1 [shape = 'u32[72,128]{1,0:T(1,128)}', space=vmem, size = 0x9000, scoped, tag = 'internal scratch']
  #allocation2 [shape = 's32[1]{0}', space=sflag, size = 0x4, scoped, tag = 'scoped memory for tpu_custom_call.1']
  #allocation3 [shape = 'u8[512]{0}', space=smem, size = 0x200, scoped, tag = 'prefetched SMEM operand 0']
  #allocation4 [shape = 's32[1]{0:T(128)S(6)}', space=smem, size = 0x200, scoped, tag = 'prefetched SMEM operand 1']
  %s0 = inlined_call_operand.vmem [shape: s32[5], index: 0, kind: input, shape index: {}]
  %s1 = inlined_call_operand.<no memory space> [shape: s32[1], index: 1, kind: input, shape index: {}]
  %s2 = inlined_call_operand.vmem [shape: bf16[160,32], index: 2, kind: input, shape index: {}]
  %s3 = inlined_call_operand.vmem [shape: f32[160,1], index: 3, kind: input, shape index: {}]
  %s4 = inlined_call_operand.vmem [shape: bf16[4,32,128], index: 4, kind: input, shape index: {}]
  %s5 = inlined_call_operand.vmem [shape: bf16[4,64,32], index: 5, kind: input, shape index: {}]
  %s6 = inlined_call_operand.vmem [shape: f32[160,32], index: 6, kind: output, shape index: {}]
  %s7 = sld [smem:[#allocation0]]
  $region57: #{tpu_custom_call.1} parent=0
    _
  %s9 = ssub.s32 1, %s7
  %s10 = scalar_select 0, %s9, %s7
  %s12 = sshll.u32 %s0, 4
  %s13 = int_to_ptr.vmem [resolvable:$true] %s12
  %15 = dma.vmem_to_smem %s13, 16, [#allocation3], [#allocation2]
  %16 = sst [smem:[#allocation4]] %s1
  %18 = dma.done [#allocation2], 16
  %19 = sfence
  loop: start=0, step=1, limit=7
  $region2: #{tpu_custom_call.1} parent=0 // loop_pre_header
    _
  $region3: #{tpu_custom_call.1} parent=0 // loop_header
    %s21 = sphi 0, %s25
    %p22 = scmp.ge.s32.totalorder %s21, 7
    %s28 = sphi 0, %s40
    %s29 = sphi 0, %s36
    %s30 = sphi 0, %s28
    %s31 = sphi 0, %s29
    %s32 = sphi 0, %s30
    %s33 = sphi 0, %s31
    %s43 = sphi 0, %s45
    %s46 = sphi 0, %s43
    %s47 = sphi 0, %s46
    %s63 = sphi 0, %s47
    %s69 = sphi 0, %s71
    %s72 = sphi 0, %s69
    %s73 = sphi 0, %s72
    %s89 = sphi 0, %s73
    %s99 = sphi 0, %s101
    %s102 = sphi 0, %s99
    %s103 = sphi 0, %s102
    %s119 = sphi 0, %s103
    %s129 = sphi 0, %s131
    %s132 = sphi 0, %s129
    %s133 = sphi 0, %s132
    %s149 = sphi 0, %s133
    %s155 = sphi 0, %s157
    %s158 = sphi 0, %s155
    %s159 = sphi 0, %s158
    %s175 = sphi 0, %s159
  $region4: #{tpu_custom_call.1} parent=0 // loop_header_branch
    %24 = sbr.rel (%p22) target = $region8
  $region5: #{tpu_custom_call.1} parent=0 // loop_body
    %s26 = ssub.s32 %s21, 1
    %s27 = ssub.s32 %s21, 2
    %s34 = sadd.s32 1, %s29
    %p35 = scmp.ge.s32.totalorder %s34, 1
    %s36 = scalar_select %p35, 0, %s34
    %s37 = sadd.s32 1, %s28
    %s38 = scalar_select %p35, %s37, %s28
    %p39 = scmp.ge.s32.totalorder %s38, 5
    %s40 = scalar_select %p39, 0, %s38
    %s41 = ssub.s32 %s28, %s40
    %p42 = scmp.eq.s32.totalorder %s41, 0
    %s44 = sadd.s32 %s43, 1
    %s45 = scalar_select %p42, %s43, %s44
    %p48 = pneg %p42
    %p49 = scmp.eq.s32.totalorder %s21, 4
    %p50 = por %p48, %p49
    %p51 = scmp.ne.s32.totalorder %s43, %s46
    %p52 = scmp.eq.s32.totalorder %s21, 0
    %p53 = por %p51, %p52
    %p54 = scmp.ne.s32.totalorder %s43, %s46
    %p55 = scmp.eq.s32.totalorder %s26, 4
    %p56 = por %p54, %p55
    %p57 = scmp.ne.s32.totalorder %s46, %s47
    %p58 = scmp.eq.s32.totalorder %s26, 0
    %p59 = por %p57, %p58
    %p60 = scmp.ne.s32.totalorder %s46, %s47
    %p61 = scmp.eq.s32.totalorder %s27, 4
    %p62 = por %p60, %p61
    %p64 = scmp.ne.s32.totalorder %s47, %s63
    %p65 = scmp.eq.s32.totalorder %s27, 0
    %p66 = por %p64, %p65
    %s67 = ssub.s32 %s28, %s40
    %p68 = scmp.eq.s32.totalorder %s67, 0
    %s70 = sadd.s32 %s69, 1
    %s71 = scalar_select %p68, %s69, %s70
    %p74 = pneg %p68
    %p75 = scmp.eq.s32.totalorder %s21, 4
    %p76 = por %p74, %p75
    %p77 = scmp.ne.s32.totalorder %s69, %s72
    %p78 = scmp.eq.s32.totalorder %s21, 0
    %p79 = por %p77, %p78
    %p80 = scmp.ne.s32.totalorder %s69, %s72
    %p81 = scmp.eq.s32.totalorder %s26, 4
    %p82 = por %p80, %p81
    %p83 = scmp.ne.s32.totalorder %s72, %s73
    %p84 = scmp.eq.s32.totalorder %s26, 0
    %p85 = por %p83, %p84
    %p86 = scmp.ne.s32.totalorder %s72, %s73
    %p87 = scmp.eq.s32.totalorder %s27, 4
    %p88 = por %p86, %p87
    %p90 = scmp.ne.s32.totalorder %s73, %s89
    %p91 = scmp.eq.s32.totalorder %s27, 0
    %p92 = por %p90, %p91
    %s93 = sld [smem:[#allocation3 + %s28]]
    %s94 = sld [smem:[#allocation3 + %s40]]
    %s95 = ssub.s32 %s93, %s94
    %s96 = ssub.s32 %s29, %s36
    %s97 = sor.u32 %s95, %s96
    %p98 = scmp.eq.s32.totalorder %s97, 0
    %s100 = sadd.s32 %s99, 1
    %s101 = scalar_select %p98, %s99, %s100
    %p104 = pneg %p98
    %p105 = scmp.eq.s32.totalorder %s21, 4
    %p106 = por %p104, %p105
    %p107 = scmp.ne.s32.totalorder %s99, %s102
    %p108 = scmp.eq.s32.totalorder %s21, 0
    %p109 = por %p107, %p108
    %p110 = scmp.ne.s32.totalorder %s99, %s102
    %p111 = scmp.eq.s32.totalorder %s26, 4
    %p112 = por %p110, %p111
    %p113 = scmp.ne.s32.totalorder %s102, %s103
    %p114 = scmp.eq.s32.totalorder %s26, 0
    %p115 = por %p113, %p114
    %p116 = scmp.ne.s32.totalorder %s102, %s103
    %p117 = scmp.eq.s32.totalorder %s27, 4
    %p118 = por %p116, %p117
    %p120 = scmp.ne.s32.totalorder %s103, %s119
    %p121 = scmp.eq.s32.totalorder %s27, 0
    %p122 = por %p120, %p121
    %s123 = sld [smem:[#allocation3 + %s28]]
    %s124 = sld [smem:[#allocation3 + %s40]]
    %s125 = ssub.s32 %s123, %s124
    %s126 = ssub.s32 %s29, %s36
    %s127 = sor.u32 %s125, %s126
    %p128 = scmp.eq.s32.totalorder %s127, 0
    %s130 = sadd.s32 %s129, 1
    %s131 = scalar_select %p128, %s129, %s130
    %p134 = pneg %p128
    %p135 = scmp.eq.s32.totalorder %s21, 4
    %p136 = por %p134, %p135
    %p137 = scmp.ne.s32.totalorder %s129, %s132
    %p138 = scmp.eq.s32.totalorder %s21, 0
    %p139 = por %p137, %p138
    %p140 = scmp.ne.s32.totalorder %s129, %s132
    %p141 = scmp.eq.s32.totalorder %s26, 4
    %p142 = por %p140, %p141
    %p143 = scmp.ne.s32.totalorder %s132, %s133
    %p144 = scmp.eq.s32.totalorder %s26, 0
    %p145 = por %p143, %p144
    %p146 = scmp.ne.s32.totalorder %s132, %s133
    %p147 = scmp.eq.s32.totalorder %s27, 4
    %p148 = por %p146, %p147
    %p150 = scmp.ne.s32.totalorder %s133, %s149
    %p151 = scmp.eq.s32.totalorder %s27, 0
    %p152 = por %p150, %p151
    %s153 = ssub.s32 %s28, %s40
    %p154 = scmp.eq.s32.totalorder %s153, 0
    %s156 = sadd.s32 %s155, 1
    %s157 = scalar_select %p154, %s155, %s156
    %p160 = pneg %p154
    %p161 = scmp.eq.s32.totalorder %s21, 4
    %p162 = por %p160, %p161
    %p163 = scmp.ne.s32.totalorder %s155, %s158
    %p164 = scmp.eq.s32.totalorder %s21, 0
    %p165 = por %p163, %p164
    %p166 = scmp.ne.s32.totalorder %s155, %s158
    %p167 = scmp.eq.s32.totalorder %s26, 4
    %p168 = por %p166, %p167
    %p169 = scmp.ne.s32.totalorder %s158, %s159
    %p170 = scmp.eq.s32.totalorder %s26, 0
    %p171 = por %p169, %p170
    %p172 = scmp.ne.s32.totalorder %s158, %s159
    %p173 = scmp.eq.s32.totalorder %s27, 4
    %p174 = por %p172, %p173
    %p176 = scmp.ne.s32.totalorder %s159, %s175
    %p177 = scmp.eq.s32.totalorder %s27, 0
    %p178 = por %p176, %p177
    %p179 = scmp.le.s32.totalorder 1, %s21
    %p180 = scmp.lt.s32.totalorder %s21, 6
    %p181 = pnand %p179, %p180
    %p182 = pneg %p181
    // Predicated region
    $region9: #{tpu_custom_call.1} parent=5 // pred_check
      _
    $region10: #{tpu_custom_call.1} parent=5 // pred_check_branch
      %184 = sbr.rel (%p181) target = $region12
    $region11: #{tpu_custom_call.1} parent=5 // pred_region
      %s185 = ssub.s32 %s21, 1
    $region12: #{tpu_custom_call.1} parent=5 // pred_fallthru
      _
    %p186 = scmp.lt.s32.totalorder %s21, 5
    // Predicated region
    $region13: #{tpu_custom_call.1} parent=5 // pred_check
      %p187 = pneg %p186
    $region14: #{tpu_custom_call.1} parent=5 // pred_check_branch
      %189 = sbr.rel (%p187) target = $region16
    $region15: #{tpu_custom_call.1} parent=5 // pred_region
      // Predicated region
      $region17: #{tpu_custom_call.1} parent=15 // pred_check
        %p190 = pneg %p53
      $region18: #{tpu_custom_call.1} parent=15 // pred_check_branch
        %192 = sbr.rel (%p190) target = $region20
      $region19: #{tpu_custom_call.1} parent=15 // pred_region
        %s193 = smul.u32 4, %s28
        %p194 = scmp.lt.s32.totalorder %s193, 19
        %s195 = scalar_select %p194, %s193, 19
        %s196 = smul.addr %s195, 4
        %s197 = scalar_lea.vmem %s2, %s196
        %s198 = smul.u32 4, %s28
      $region20: #{tpu_custom_call.1} parent=15 // pred_fallthru
        _
      // Predicated region
      $region21: #{tpu_custom_call.1} parent=15 // pred_check
        %p199 = pneg %p79
      $region22: #{tpu_custom_call.1} parent=15 // pred_check_branch
        %201 = sbr.rel (%p199) target = $region24
      $region23: #{tpu_custom_call.1} parent=15 // pred_region
        %s202 = smul.u32 4, %s28
        %p203 = scmp.lt.s32.totalorder %s202, 19
        %s204 = scalar_select %p203, %s202, 19
        %s205 = smul.addr %s204, 8
        %s206 = scalar_lea.vmem %s3, %s205
        %s207 = smul.u32 4, %s28
      $region24: #{tpu_custom_call.1} parent=15 // pred_fallthru
        _
      // Predicated region
      $region25: #{tpu_custom_call.1} parent=15 // pred_check
        %p208 = pneg %p109
      $region26: #{tpu_custom_call.1} parent=15 // pred_check_branch
        %210 = sbr.rel (%p208) target = $region28
      $region27: #{tpu_custom_call.1} parent=15 // pred_region
        %s211 = sld [smem:[#allocation3 + %s28]]
        %p212 = scmp.lt.s32.totalorder %s211, 3
        %s213 = scalar_select %p212, %s211, 3
        %p214 = scmp.lt.s32.totalorder %s29, 0
        %s215 = scalar_select %p214, %s29, 0
        %s216 = smul.addr %s213, 4
        %s217 = sadd.s32 %s215, %s216
        %s218 = smul.addr %s217, 4
        %s219 = scalar_lea.vmem %s4, %s218
        %s220 = sld [smem:[#allocation3 + %s28]]
      $region28: #{tpu_custom_call.1} parent=15 // pred_fallthru
        _
      // Predicated region
      $region29: #{tpu_custom_call.1} parent=15 // pred_check
        %p221 = pneg %p139
      $region30: #{tpu_custom_call.1} parent=15 // pred_check_branch
        %223 = sbr.rel (%p221) target = $region32
      $region31: #{tpu_custom_call.1} parent=15 // pred_region
        %s224 = sld [smem:[#allocation3 + %s28]]
        %s225 = smul.u32 8, %s29
        %p226 = scmp.lt.s32.totalorder %s224, 3
        %s227 = scalar_select %p226, %s224, 3
        %p228 = scmp.lt.s32.totalorder %s225, 7
        %s229 = scalar_select %p228, %s225, 7
        %s230 = smul.addr %s227, 8
        %s231 = sadd.s32 %s229, %s230
        %s232 = smul.addr %s231, 4
        %s233 = scalar_lea.vmem %s5, %s232
        %s234 = sld [smem:[#allocation3 + %s28]]
        %s235 = smul.u32 8, %s29
      $region32: #{tpu_custom_call.1} parent=15 // pred_fallthru
        _
    $region16: #{tpu_custom_call.1} parent=5 // pred_fallthru
      _
    %p236 = scmp.le.s32.totalorder 1, %s21
    %p237 = scmp.lt.s32.totalorder %s21, 6
    %p238 = pnand %p236, %p237
    %p239 = pneg %p238
    // Predicated region
    $region33: #{tpu_custom_call.1} parent=5 // pred_check
      _
    $region34: #{tpu_custom_call.1} parent=5 // pred_check_branch
      %241 = sbr.rel (%p238) target = $region36
    $region35: #{tpu_custom_call.1} parent=5 // pred_region
      %s242 = ssub.s32 %s21, 1
      %s243 = smul.u32 4, %s30
      %p244 = scmp.lt.s32.totalorder %s243, 19
      %s245 = scalar_select %p244, %s243, 19
      %s246 = smul.addr %s245, 4
      %s247 = scalar_lea.vmem %s2, %s246
      %p248 = pneg %p59
      %p249 = pneg %p56
      %s250 = smul.u32 4, %s30
      %p251 = scmp.lt.s32.totalorder %s250, 19
      %s252 = scalar_select %p251, %s250, 19
      %s253 = smul.addr %s252, 8
      %s254 = scalar_lea.vmem %s3, %s253
      %p255 = pneg %p85
      %p256 = pneg %p82
      %s257 = sld [smem:[#allocation3 + %s30]]
      %p258 = scmp.lt.s32.totalorder %s257, 3
      %s259 = scalar_select %p258, %s257, 3
      %p260 = scmp.lt.s32.totalorder %s31, 0
      %s261 = scalar_select %p260, %s31, 0
      %s262 = smul.addr %s259, 4
      %s263 = sadd.s32 %s261, %s262
      %s264 = smul.addr %s263, 4
      %s265 = scalar_lea.vmem %s4, %s264
      %p266 = pneg %p115
      %p267 = pneg %p112
      %s268 = sld [smem:[#allocation3 + %s30]]
      %s269 = smul.u32 8, %s31
      %p270 = scmp.lt.s32.totalorder %s268, 3
      %s271 = scalar_select %p270, %s268, 3
      %p272 = scmp.lt.s32.totalorder %s269, 7
      %s273 = scalar_select %p272, %s269, 7
      %s274 = smul.addr %s271, 8
      %s275 = sadd.s32 %s273, %s274
      %s276 = smul.addr %s275, 4
      %s277 = scalar_lea.vmem %s5, %s276
      %p278 = pneg %p145
      %p279 = pneg %p142
      %p280 = pneg %p171
      %p281 = pneg %p168
      %s282 = smul.u32 4, %s30
      %p283 = scmp.lt.s32.totalorder %s282, 19
      %s284 = scalar_select %p283, %s282, 19
      %s285 = smul.addr %s284, 8
      %s286 = scalar_lea.vmem %s6, %s285
      %s287 = smul.u32 4, %s30
      %p288 = scmp.lt.s32.totalorder %s287, 19
      %s289 = scalar_select %p288, %s287, 19
      %s290 = smul.addr %s289, 4
      %s291 = scalar_lea.vmem %s2, %s290
      %s292 = smul.u32 4, %s30
      %s293 = smul.u32 4, %s30
      %p294 = scmp.lt.s32.totalorder %s293, 19
      %s295 = scalar_select %p294, %s293, 19
      %s296 = smul.addr %s295, 8
      %s297 = scalar_lea.vmem %s3, %s296
      %s298 = smul.u32 4, %s30
      %s299 = sld [smem:[#allocation3 + %s30]]
      %p300 = scmp.lt.s32.totalorder %s299, 3
      %s301 = scalar_select %p300, %s299, 3
      %p302 = scmp.lt.s32.totalorder %s31, 0
      %s303 = scalar_select %p302, %s31, 0
      %s304 = smul.addr %s301, 4
      %s305 = sadd.s32 %s303, %s304
      %s306 = smul.addr %s305, 4
      %s307 = scalar_lea.vmem %s4, %s306
      %s308 = sld [smem:[#allocation3 + %s30]]
      %s309 = sld [smem:[#allocation3 + %s30]]
      %s310 = smul.u32 8, %s31
      %p311 = scmp.lt.s32.totalorder %s309, 3
      %s312 = scalar_select %p311, %s309, 3
      %p313 = scmp.lt.s32.totalorder %s310, 7
      %s314 = scalar_select %p313, %s310, 7
      %s315 = smul.addr %s312, 8
      %s316 = sadd.s32 %s314, %s315
      %s317 = smul.addr %s316, 4
      %s318 = scalar_lea.vmem %s5, %s317
      %s319 = sld [smem:[#allocation3 + %s30]]
      %s320 = smul.u32 8, %s31
      %s321 = smul.u32 4, %s30
      %p322 = scmp.lt.s32.totalorder %s321, 19
      %s323 = scalar_select %p322, %s321, 19
      %s324 = smul.addr %s323, 8
      %s325 = scalar_lea.vmem %s6, %s324
      %s326 = smul.u32 4, %s30
      %p328 = scmp.eq.s32.totalorder %s31, 0
      // Predicated region
      $region37: #{tpu_custom_call.1} parent=35 // pred_check
        %p329 = pneg %p328
      $region38: #{tpu_custom_call.1} parent=35 // pred_check_branch
        %331 = sbr.rel (%p329) target = $region40
      $region39: #{tpu_custom_call.1} parent=35 // pred_region
        %vm332 = vcmask 261120
        %333 = vst.msk [vmem:[%s325] sm:$0xff] %vm332, 0.0
        %334 = vst.msk [vmem:[%s325 + $0x8] sm:$0xff] %vm332, 0.0
        %335 = vst.msk [vmem:[%s325 + $0x10] sm:$0xff] %vm332, 0.0
        %336 = vst.msk [vmem:[%s325 + $0x18] sm:$0xff] %vm332, 0.0
      $region40: #{tpu_custom_call.1} parent=35 // pred_fallthru
        _
      %s337 = sld [smem:[#allocation4]]
      %p338 = scmp.lt.s32.totalorder %s30, %s337
      // Predicated region
      $region41: #{tpu_custom_call.1} parent=35 // pred_check
        %p339 = pneg %p338
      $region42: #{tpu_custom_call.1} parent=35 // pred_check_branch
        %341 = sbr.rel (%p339) target = $region44
      $region43: #{tpu_custom_call.1} parent=35 // pred_region
        %v342 = vld [vmem:[%s291] sm:$0xf]
        %v343 = vld [vmem:[%s291 + $0x4] sm:$0xf]
        %v344 = vld [vmem:[%s291 + $0x8] sm:$0xf]
        %v345 = vld [vmem:[%s291 + $0xc] sm:$0xf]
        %v346 = vld [vmem:[%s307] sm:$0xf]
        %v347 = vld [vmem:[%s307 + $0x4] sm:$0xf]
        %v348 = vld [vmem:[%s307 + $0x8] sm:$0xf]
        %v349 = vld [vmem:[%s307 + $0xc] sm:$0xf]
        %v354 = vunpack.c.l.b16 %v342
        %v355 = vunpack.c.l.b16 %v343
        %v356 = vunpack.c.l.b16 %v344
        %v357 = vunpack.c.l.b16 %v345
        %v358 = vpack.c.b16 %v355, %v354
        %v359 = vpack.c.b16 %v357, %v356
        %v364 = vunpack.c.l.b16 %v346
        %v365 = vunpack.c.l.b16 %v347
        %v366 = vunpack.c.l.b16 %v348
        %v367 = vunpack.c.l.b16 %v349
        %v368 = vpack.c.b16 %v365, %v364
        %v369 = vpack.c.b16 %v367, %v366
        %vm372 = vcmask 261120
        %v374 = vsel %vm372, %v358, 0
        %v377 = vsel %vm372, %v359, 0
        %379 = vmatpush.bf16.msra.mxu0 0
        %380 = vmatpush.bf16.msra.mxu0 0
        %381 = vmatpush.bf16.msra.mxu0 0
        %382 = vmatpush.bf16.msra.mxu0 0
        %383 = vmatpush.bf16.msra.mxu0 0
        %384 = vmatpush.bf16.msra.mxu0 0
        %385 = vmatpush.bf16.msra.mxu0 %v369
        %386 = vmatpush.bf16.msra.mxu0 %v368
        %387 = vmatmul.bf16.gmra.mxu0 %v374
        %v388 = vpop.f32.mrf.mxu0
        %v389 = vadd.f32 0.0, %v388
        %v390 = vpop.f32.mrf.mxu0
        %v391 = vadd.f32 0.0, %v390
        %392 = vmatmul.bf16.gmra.mxu0 %v377
        %v393 = vpop.f32.mrf.mxu0
        %v394 = vadd.f32 0.0, %v393
        %v395 = vpop.f32.mrf.mxu0
        %v396 = vadd.f32 0.0, %v395
        %397 = vdwg.mxu0
        %v398 = vxor.u32 %v389, 2147483648
        %v399 = vxor.u32 %v391, 2147483648
        %v400 = vxor.u32 %v394, 2147483648
        %v401 = vxor.u32 %v396, 2147483648
        %v402 = vmul.f32 %v398, 1.442695
        %v403 = vpow.pop %v402
        %v404 = vmul.f32 %v399, 1.442695
        %v405 = vpow.pop %v404
        %v406 = vmul.f32 %v400, 1.442695
        %v407 = vpow.pop %v406
        %v408 = vmul.f32 %v401, 1.442695
        %v409 = vpow.pop %v408
        %v410 = vadd.f32 %v403, 1.0
        %v411 = vadd.f32 %v405, 1.0
        %v412 = vadd.f32 %v407, 1.0
        %v413 = vadd.f32 %v409, 1.0
        %v414 = vrcp.pop %v410
        %v415 = vmul.f32 %v410, %v414
        %v416 = vsub.f32 1.0, %v415
        %v417 = vmul.f32 %v414, %v416
        %v418 = vadd.f32 %v414, %v417
        %vm419 = vweird.f32 %v410
        %vm420 = vweird.f32 %v414
        %vm421 = vmor %vm419, %vm420
        %v422 = vsel %vm421, %v414, %v418
        %v423 = vand.u32 2147483647, %v410
        %vm424 = vcmp.eq.f32.partialorder %v423, 8.507059e+37
        %v425 = vand.u32 %v410, 2147483648
        %v426 = vor.u32 1.1754944e-38, %v425
        %v427 = vsel %vm424, %v426, %v422
        %v428 = vmul.f32 1.0, %v427
        %v429 = vrcp.pop %v411
        %v430 = vmul.f32 %v411, %v429
        %v431 = vsub.f32 1.0, %v430
        %v432 = vmul.f32 %v429, %v431
        %v433 = vadd.f32 %v429, %v432
        %vm434 = vweird.f32 %v411
        %vm435 = vweird.f32 %v429
        %vm436 = vmor %vm434, %vm435
        %v437 = vsel %vm436, %v429, %v433
        %v438 = vand.u32 2147483647, %v411
        %vm439 = vcmp.eq.f32.partialorder %v438, 8.507059e+37
        %v440 = vand.u32 %v411, 2147483648
        %v441 = vor.u32 1.1754944e-38, %v440
        %v442 = vsel %vm439, %v441, %v437
        %v443 = vmul.f32 1.0, %v442
        %v444 = vrcp.pop %v412
        %v445 = vmul.f32 %v412, %v444
        %v446 = vsub.f32 1.0, %v445
        %v447 = vmul.f32 %v444, %v446
        %v448 = vadd.f32 %v444, %v447
        %vm449 = vweird.f32 %v412
        %vm450 = vweird.f32 %v444
        %vm451 = vmor %vm449, %vm450
        %v452 = vsel %vm451, %v444, %v448
        %v453 = vand.u32 2147483647, %v412
        %vm454 = vcmp.eq.f32.partialorder %v453, 8.507059e+37
        %v455 = vand.u32 %v412, 2147483648
        %v456 = vor.u32 1.1754944e-38, %v455
        %v457 = vsel %vm454, %v456, %v452
        %v458 = vmul.f32 1.0, %v457
        %v459 = vrcp.pop %v413
        %v460 = vmul.f32 %v413, %v459
        %v461 = vsub.f32 1.0, %v460
        %v462 = vmul.f32 %v459, %v461
        %v463 = vadd.f32 %v459, %v462
        %vm464 = vweird.f32 %v413
        %vm465 = vweird.f32 %v459
        %vm466 = vmor %vm464, %vm465
        %v467 = vsel %vm466, %v459, %v463
        %v468 = vand.u32 2147483647, %v413
        %vm469 = vcmp.eq.f32.partialorder %v468, 8.507059e+37
        %v470 = vand.u32 %v413, 2147483648
        %v471 = vor.u32 1.1754944e-38, %v470
        %v472 = vsel %vm469, %v471, %v467
        %v473 = vmul.f32 1.0, %v472
        %v474 = vmul.f32 %v389, %v428
        %v475 = vmul.f32 %v391, %v443
        %v476 = vmul.f32 %v394, %v458
        %v477 = vmul.f32 %v396, %v473
        %482 = vrot.lane.b32.xlu0 %v389, 64
        %v483 = vpop.permute.xlu0 %482
        %484 = vrot.lane.b32.xlu0 %v391, 64
        %v485 = vpop.permute.xlu0 %484
        %486 = vrot.lane.b32.xlu0 %v394, 64
        %v487 = vpop.permute.xlu0 %486
        %488 = vrot.lane.b32.xlu0 %v396, 64
        %v489 = vpop.permute.xlu0 %488
        %v494 = vmul.f32 %v474, %v483
        %v495 = vmul.f32 %v475, %v485
        %v496 = vmul.f32 %v476, %v487
        %v497 = vmul.f32 %v477, %v489
        %v498 = vld [vmem:[%s297] sm:$0xff]
        %v499 = vld [vmem:[%s297 + $0x8] sm:$0xff]
        %v500 = vld [vmem:[%s297 + $0x10] sm:$0xff]
        %v501 = vld [vmem:[%s297 + $0x18] sm:$0xff]
        %503 = vset.pattern.permute.xlu0 0
        %504 = vperm.xlu0 %503, %v498
        %v505 = vpop.permute.xlu0 %504
        %508 = vset.pattern.permute.xlu0 0
        %509 = vperm.xlu0 %508, %v499
        %v510 = vpop.permute.xlu0 %509
        %513 = vset.pattern.permute.xlu0 0
        %514 = vperm.xlu0 %513, %v500
        %v515 = vpop.permute.xlu0 %514
        %518 = vset.pattern.permute.xlu0 0
        %519 = vperm.xlu0 %518, %v501
        %v520 = vpop.permute.xlu0 %519
        %v522 = vmul.f32 %v494, %v505
        %v523 = vmul.f32 %v495, %v510
        %v524 = vmul.f32 %v496, %v515
        %v525 = vmul.f32 %v497, %v520
        %v526 = vld [vmem:[%s325] sm:$0xff]
        %v527 = vld [vmem:[%s325 + $0x8] sm:$0xff]
        %v528 = vld [vmem:[%s325 + $0x10] sm:$0xff]
        %v529 = vld [vmem:[%s325 + $0x18] sm:$0xff]
        %v530 = vpack.c.bf16 %v523, %v522
        %v531 = vpack.c.bf16 %v525, %v524
        %v532 = vld [vmem:[%s318] sm:$0xf]
        %v533 = vld [vmem:[%s318 + $0x4] sm:$0xf]
        %v534 = vld [vmem:[%s318 + $0x8] sm:$0xf]
        %v535 = vld [vmem:[%s318 + $0xc] sm:$0xf]
        %v536 = vld [vmem:[%s318 + $0x10] sm:$0xf]
        %v537 = vld [vmem:[%s318 + $0x14] sm:$0xf]
        %v538 = vld [vmem:[%s318 + $0x18] sm:$0xf]
        %v539 = vld [vmem:[%s318 + $0x1c] sm:$0xf]
        %v548 = vunpack.c.l.b16 %v532
        %v549 = vunpack.c.l.b16 %v533
        %v550 = vunpack.c.l.b16 %v534
        %v551 = vunpack.c.l.b16 %v535
        %v552 = vunpack.c.l.b16 %v536
        %v553 = vunpack.c.l.b16 %v537
        %v554 = vunpack.c.l.b16 %v538
        %v555 = vunpack.c.l.b16 %v539
        %v556 = vpack.c.b16 %v549, %v548
        %v557 = vpack.c.b16 %v551, %v550
        %v558 = vpack.c.b16 %v553, %v552
        %v559 = vpack.c.b16 %v555, %v554
        %vm564 = vcmask 523264
        %v566 = vsel %vm564, %v530, 0
        %v569 = vsel %vm564, %v531, 0
        %571 = vmatpush.bf16.msra.mxu0 0
        %572 = vmatpush.bf16.msra.mxu0 0
        %573 = vmatpush.bf16.msra.mxu0 0
        %574 = vmatpush.bf16.msra.mxu0 0
        %575 = vmatpush.bf16.msra.mxu0 %v559
        %576 = vmatpush.bf16.msra.mxu0 %v558
        %577 = vmatpush.bf16.msra.mxu0 %v557
        %578 = vmatpush.bf16.msra.mxu0 %v556
        %579 = vmatmul.bf16.gmra.mxu0 %v566
        %v580 = vpop.f32.mrf.mxu0
        %v581 = vadd.f32 0.0, %v580
        %v582 = vpop.f32.mrf.mxu0
        %v583 = vadd.f32 0.0, %v582
        %584 = vmatmul.bf16.gmra.mxu0 %v569
        %v585 = vpop.f32.mrf.mxu0
        %v586 = vadd.f32 0.0, %v585
        %v587 = vpop.f32.mrf.mxu0
        %v588 = vadd.f32 0.0, %v587
        %589 = vdwg.mxu0
        %v590 = vadd.f32 %v526, %v581
        %v591 = vadd.f32 %v527, %v583
        %v592 = vadd.f32 %v528, %v586
        %v593 = vadd.f32 %v529, %v588
        %594 = vst.msk [vmem:[%s325] sm:$0xff] %vm372, %v590
        %595 = vst.msk [vmem:[%s325 + $0x8] sm:$0xff] %vm372, %v591
        %596 = vst.msk [vmem:[%s325 + $0x10] sm:$0xff] %vm372, %v592
        %597 = vst.msk [vmem:[%s325 + $0x18] sm:$0xff] %vm372, %v593
      $region44: #{tpu_custom_call.1} parent=35 // pred_fallthru
        _
      %s598 = smul.u32 4, %s30
      %p599 = scmp.lt.s32.totalorder %s598, 19
      %s600 = scalar_select %p599, %s598, 19
      %s601 = smul.addr %s600, 8
      %s602 = scalar_lea.vmem %s6, %s601
      // Predicated region
      $region45: #{tpu_custom_call.1} parent=35 // pred_check
        %p603 = pneg %p168
      $region46: #{tpu_custom_call.1} parent=35 // pred_check_branch
        %605 = sbr.rel (%p603) target = $region48
      $region47: #{tpu_custom_call.1} parent=35 // pred_region
        %s606 = smul.u32 4, %s30
      $region48: #{tpu_custom_call.1} parent=35 // pred_fallthru
        _
    $region36: #{tpu_custom_call.1} parent=5 // pred_fallthru
      _
    %p607 = scmp.le.s32.totalorder 2, %s21
    // Predicated region
    $region49: #{tpu_custom_call.1} parent=5 // pred_check
      %p608 = pneg %p607
    $region50: #{tpu_custom_call.1} parent=5 // pred_check_branch
      %610 = sbr.rel (%p608) target = $region52
    $region51: #{tpu_custom_call.1} parent=5 // pred_region
      %s611 = ssub.s32 %s21, 2
      // Predicated region
      $region53: #{tpu_custom_call.1} parent=51 // pred_check
        %p612 = pneg %p174
      $region54: #{tpu_custom_call.1} parent=51 // pred_check_branch
        %614 = sbr.rel (%p612) target = $region56
      $region55: #{tpu_custom_call.1} parent=51 // pred_region
        %s615 = smul.u32 4, %s32
        %p616 = scmp.lt.s32.totalorder %s615, 19
        %s617 = scalar_select %p616, %s615, 19
        %s618 = smul.addr %s617, 8
        %s619 = scalar_lea.vmem %s6, %s618
      $region56: #{tpu_custom_call.1} parent=51 // pred_fallthru
        _
    $region52: #{tpu_custom_call.1} parent=5 // pred_fallthru
      _
  $region6: #{tpu_custom_call.1} parent=0 // loop_footer
    %s25 = sadd.s32 1, %s21
  $region7: #{tpu_custom_call.1} parent=0 // loop_footer_branch
    %20 = sbr.rel target = $region3
  $region8: #{tpu_custom_call.1} parent=0 // loop_exit
    _

</llo_original>
